<compile_context>
chip_gen: v6e
topology: v6e:2x2x1
jax: 0.10.0
libtpu: 0.0.40
codegen_flags: <defaults>
</compile_context>

<pallas_src>
import functools

import jax
import jax.numpy as jnp
from jax.experimental import pallas as pl
from jax.experimental.pallas import tpu as pltpu


def _dwsep_kernel(xp_ref, wdw_ref, wbig_ref, b1_ref, b2_ref, o_ref,
                  *, H, W, K, C, O):
    # xp_ref  : (1, H+2, (W+2)*C)  zero-padded, lane-flattened NHWC input (bf16)
    # wdw_ref : (K*K, W*C)         depthwise weights, BN1 scale folded, tiled over W (f32)
    # wbig_ref: (W*C, W*O)         block-diagonal pointwise weights, BN2 scale folded (f32)
    # b1_ref  : (1, W*C)           folded BN1 bias, tiled over W
    # b2_ref  : (1, W*O)           folded BN2 bias, tiled over W
    # o_ref   : (1, H, W*O)        lane-dense output (W*O = 128 -> unmasked vst)
    WC = W * C

    # ---- depthwise 3x3 conv (stride 1, pad 1), lane-dense -------------------
    # K independent partial accumulators (one per kernel row) expose ILP
    # across the VALU slots instead of a single serial mul+add chain.
    partials = []
    for kh in range(K):
        a = jnp.zeros((H, WC), jnp.float32)
        for kw in range(K):
            tap = xp_ref[0, pl.ds(kh, H), pl.ds(kw * C, WC)].astype(jnp.float32)
            a = a + tap * wdw_ref[pl.ds(kh * K + kw, 1), :]
        partials.append(a)
    acc = partials[0]
    for a in partials[1:]:
        acc = acc + a                                    # (H, W*C)

    # ---- BN1 bias (scale folded into wdw) + ReLU ----------------------------
    y1 = jnp.maximum(acc + b1_ref[...], 0.0)             # (H, W*C)

    # ---- pointwise 1x1 conv directly in the (H, W*O) output layout ----------
    # Block-diagonal matmul on the otherwise-idle MXU: no channel reshape or
    # relayout is needed; both operands and the result are lane-dense.
    y2 = jnp.dot(y1, wbig_ref[...], preferred_element_type=jnp.float32)

    # ---- BN2 bias (scale folded into wbig) + ReLU ---------------------------
    y2 = jnp.maximum(y2 + b2_ref[...], 0.0)               # (H, W*O)

    # ---- lane-dense store: last dim W*O = 128 -> unmasked full-lane vst -----
    o_ref[0] = y2.astype(o_ref.dtype)


def depthwise_conv_forward(x_nchw, w_dw, w_pt,
                           gamma1, beta1, mean1, var1,
                           gamma2, beta2, mean2, var2,
                           eps=1e-5, dma_dtype=jnp.bfloat16):
    """Fused DepthWiseConv forward.  x_nchw: (N, C, H, W) -> (N, O, H, W)."""
    N, C, H, W = x_nchw.shape
    K = w_dw.shape[0]
    O = w_pt.shape[-1]
    assert K == 3, "kernel written for ksize=3, stride=1, padding=1"

    # Fold BN (eval mode) into the conv weights / a single per-channel bias.
    s1 = gamma1 / jnp.sqrt(var1 + eps)                       # (C,)
    b1 = (beta1 - mean1 * s1).astype(jnp.float32)            # (C,)
    s2 = gamma2 / jnp.sqrt(var2 + eps)                       # (O,)
    b2 = (beta2 - mean2 * s2).astype(jnp.float32)            # (O,)
    w_dw_f = (w_dw * s1).astype(jnp.float32)                 # (K, K, C)
    w_pt_f = (w_pt * s2[None, :]).astype(jnp.float32)        # (C, O)

    # Pre-tile weights / biases to lane-dense rows (done once in the wrapper).
    wdw_rows = jnp.tile(w_dw_f.reshape(K * K, 1, C), (1, W, 1)).reshape(K * K, W * C)
    b1_row = jnp.tile(b1.reshape(1, 1, C), (1, W, 1)).reshape(1, W * C)
    b2_row = jnp.tile(b2.reshape(1, 1, O), (1, W, 1)).reshape(1, W * O)
    # Block-diagonal pointwise weight: Wbig[w*C + c, w*O + o] = wpt[c, o].
    wbig = jnp.kron(jnp.eye(W, dtype=jnp.float32), w_pt_f)   # (W*C, W*O)

    # NCHW -> padded NHWC -> lane-flattened (N, Hp, Wp*C), bf16 for the DMA.
    xp = jnp.pad(jnp.transpose(x_nchw, (0, 2, 3, 1)),
                 ((0, 0), (1, 1), (1, 1), (0, 0)))
    Hp, Wp = H + 2, W + 2
    xp = xp.reshape(N, Hp, Wp * C).astype(dma_dtype)

    kernel = functools.partial(_dwsep_kernel, H=H, W=W, K=K, C=C, O=O)

    # Grid over N keeps >=2 parallel steps for v7x's 2 TensorCores at N=2.
    # For production N, use a batch block (>=8 images) per step to amortize
    # the ~0.35 us/step pipeline overhead; on v7x re-derive block sizes
    # against the 64 MiB VMEM and set vmem_limit_bytes explicitly.
    out = pl.pallas_call(
        kernel,
        out_shape=jax.ShapeDtypeStruct((N, H, W * O), x_nchw.dtype),
        grid_spec=pltpu.PrefetchScalarGridSpec(
            num_scalar_prefetch=0,
            grid=(N,),
            in_specs=[
                pl.BlockSpec((1, Hp, Wp * C), lambda n: (n, 0, 0)),   # padded input
                pl.BlockSpec((K * K, W * C), lambda n: (0, 0)),       # dw weights (BN1 folded)
                pl.BlockSpec((W * C, W * O), lambda n: (0, 0)),       # block-diag pw weights
                pl.BlockSpec((1, W * C), lambda n: (0, 0)),           # BN1 bias row
                pl.BlockSpec((1, W * O), lambda n: (0, 0)),           # BN2 bias row
            ],
            out_specs=pl.BlockSpec((1, H, W * O), lambda n: (n, 0, 0)),
        ),
        compiler_params=pltpu.CompilerParams(
            dimension_semantics=("parallel",)),
    )(xp, wdw_rows, wbig, b1_row, b2_row)

    # (N, H, W*O) -> (N, H, W, O) -> NCHW to match the PyTorch module output.
    return jnp.transpose(out.reshape(N, H, W, O), (0, 3, 1, 2))


if __name__ == "__main__":
    # Module config: DepthWiseConv(in_channels=4, out_channels=8, ksize=3, stride=1)
    N, C, H, W = 2, 4, 16, 16
    O = 8
    K = 3

    key = jax.random.PRNGKey(0)
    k_x, k_dw, k_pt, k_g1, k_b1, k_g2, k_b2 = jax.random.split(key, 7)

    x = jax.random.normal(k_x, (N, C, H, W), dtype=jnp.float32)

    # depth_conv.weight: torch shape (C, 1, K, K) -> kernel layout (K, K, C)
    #   (w_dw = torch_w.squeeze(1).transpose(1, 2, 0))
    w_dw = 0.1 * jax.random.normal(k_dw, (K, K, C), dtype=jnp.float32)
    # point_conv.weight: torch shape (O, C, 1, 1) -> kernel layout (C, O)
    #   (w_pt = torch_w[:, :, 0, 0].T)
    w_pt = 0.1 * jax.random.normal(k_pt, (C, O), dtype=jnp.float32)

    # BatchNorm parameters (deterministic, eval-mode folding).
    gamma1 = 1.0 + 0.1 * jax.random.normal(k_g1, (C,), dtype=jnp.float32)
    beta1 = 0.1 * jax.random.normal(k_b1, (C,), dtype=jnp.float32)
    mean1 = jnp.zeros((C,), jnp.float32)
    var1 = jnp.ones((C,), jnp.float32)

    gamma2 = 1.0 + 0.1 * jax.random.normal(k_g2, (O,), dtype=jnp.float32)
    beta2 = 0.1 * jax.random.normal(k_b2, (O,), dtype=jnp.float32)
    mean2 = jnp.zeros((O,), jnp.float32)
    var2 = jnp.ones((O,), jnp.float32)

    out = depthwise_conv_forward(x, w_dw, w_pt,
                                 gamma1, beta1, mean1, var1,
                                 gamma2, beta2, mean2, var2)
    jax.block_until_ready(out)
    assert out.shape == (N, O, H, W), out.shape
    print("KERNEL_OK")
</pallas_src>

<mosaic_0001>
module attributes {stable_mosaic.version = 11 : i64} {
  func.func @_dwsep_kernel(%arg0: i32, %arg1: memref<1x18x72xbf16, #tpu.memory_space<vmem>>, %arg2: memref<9x64xf32, #tpu.memory_space<vmem>>, %arg3: memref<64x128xf32, #tpu.memory_space<vmem>>, %arg4: memref<1x64xf32, #tpu.memory_space<vmem>>, %arg5: memref<1x128xf32, #tpu.memory_space<vmem>>, %arg6: memref<1x16x128xf32, #tpu.memory_space<vmem>>) attributes {dimension_semantics = [#tpu.dimension_semantics<parallel>], iteration_bounds = array<i64: 2>, scalar_prefetch = 0 : i64, scratch_operands = 0 : i64, tpu.core_type = #tpu.core_type<tc>, window_params = [{transform_indices = @transform_0, window_bounds = array<i64: 1, 18, 72>}, {pipeline_mode = #tpu.pipeline_mode<synchronous>, transform_indices = @transform_1, window_bounds = array<i64: 9, 64>}, {pipeline_mode = #tpu.pipeline_mode<synchronous>, transform_indices = @transform_2, window_bounds = array<i64: 64, 128>}, {pipeline_mode = #tpu.pipeline_mode<synchronous>, transform_indices = @transform_3, window_bounds = array<i64: 1, 64>}, {pipeline_mode = #tpu.pipeline_mode<synchronous>, transform_indices = @transform_4, window_bounds = array<i64: 1, 128>}, {transform_indices = @transform_5, window_bounds = array<i64: 1, 16, 128>}]} {
    %cst = arith.constant 0.000000e+00 : f32
    %0 = vector.broadcast %cst : f32 to vector<16x64xf32>
    %c0 = arith.constant 0 : index
    %c0_0 = arith.constant 0 : index
    %c0_1 = arith.constant 0 : index
    %1 = vector.load %arg1[%c0, %c0_0, %c0_1] : memref<1x18x72xbf16, #tpu.memory_space<vmem>>, vector<1x16x64xbf16>
    %2 = vector.shape_cast %1 : vector<1x16x64xbf16> to vector<16x64xbf16>
    %3 = arith.extf %2 : vector<16x64xbf16> to vector<16x64xf32>
    %c0_2 = arith.constant 0 : index
    %c0_3 = arith.constant 0 : index
    %4 = vector.load %arg2[%c0_2, %c0_3] : memref<9x64xf32, #tpu.memory_space<vmem>>, vector<1x64xf32>
    %5 = vector.broadcast %4 : vector<1x64xf32> to vector<16x64xf32>
    %6 = arith.mulf %3, %5 : vector<16x64xf32>
    %7 = arith.addf %0, %6 : vector<16x64xf32>
    %c0_4 = arith.constant 0 : index
    %c0_5 = arith.constant 0 : index
    %c4 = arith.constant 4 : index
    %8 = vector.load %arg1[%c0_4, %c0_5, %c4] : memref<1x18x72xbf16, #tpu.memory_space<vmem>>, vector<1x16x64xbf16>
    %9 = vector.shape_cast %8 : vector<1x16x64xbf16> to vector<16x64xbf16>
    %10 = arith.extf %9 : vector<16x64xbf16> to vector<16x64xf32>
    %c1 = arith.constant 1 : index
    %c0_6 = arith.constant 0 : index
    %11 = vector.load %arg2[%c1, %c0_6] : memref<9x64xf32, #tpu.memory_space<vmem>>, vector<1x64xf32>
    %12 = vector.broadcast %11 : vector<1x64xf32> to vector<16x64xf32>
    %13 = arith.mulf %10, %12 : vector<16x64xf32>
    %14 = arith.addf %7, %13 : vector<16x64xf32>
    %c0_7 = arith.constant 0 : index
    %c0_8 = arith.constant 0 : index
    %c8 = arith.constant 8 : index
    %15 = vector.load %arg1[%c0_7, %c0_8, %c8] : memref<1x18x72xbf16, #tpu.memory_space<vmem>>, vector<1x16x64xbf16>
    %16 = vector.shape_cast %15 : vector<1x16x64xbf16> to vector<16x64xbf16>
    %17 = arith.extf %16 : vector<16x64xbf16> to vector<16x64xf32>
    %c2 = arith.constant 2 : index
    %c0_9 = arith.constant 0 : index
    %18 = vector.load %arg2[%c2, %c0_9] : memref<9x64xf32, #tpu.memory_space<vmem>>, vector<1x64xf32>
    %19 = vector.broadcast %18 : vector<1x64xf32> to vector<16x64xf32>
    %20 = arith.mulf %17, %19 : vector<16x64xf32>
    %21 = arith.addf %14, %20 : vector<16x64xf32>
    %cst_10 = arith.constant 0.000000e+00 : f32
    %22 = vector.broadcast %cst_10 : f32 to vector<16x64xf32>
    %c0_11 = arith.constant 0 : index
    %c1_12 = arith.constant 1 : index
    %c0_13 = arith.constant 0 : index
    %23 = vector.load %arg1[%c0_11, %c1_12, %c0_13] : memref<1x18x72xbf16, #tpu.memory_space<vmem>>, vector<1x16x64xbf16>
    %24 = vector.shape_cast %23 : vector<1x16x64xbf16> to vector<16x64xbf16>
    %25 = arith.extf %24 : vector<16x64xbf16> to vector<16x64xf32>
    %c3 = arith.constant 3 : index
    %c0_14 = arith.constant 0 : index
    %26 = vector.load %arg2[%c3, %c0_14] : memref<9x64xf32, #tpu.memory_space<vmem>>, vector<1x64xf32>
    %27 = vector.broadcast %26 : vector<1x64xf32> to vector<16x64xf32>
    %28 = arith.mulf %25, %27 : vector<16x64xf32>
    %29 = arith.addf %22, %28 : vector<16x64xf32>
    %c0_15 = arith.constant 0 : index
    %c1_16 = arith.constant 1 : index
    %c4_17 = arith.constant 4 : index
    %30 = vector.load %arg1[%c0_15, %c1_16, %c4_17] : memref<1x18x72xbf16, #tpu.memory_space<vmem>>, vector<1x16x64xbf16>
    %31 = vector.shape_cast %30 : vector<1x16x64xbf16> to vector<16x64xbf16>
    %32 = arith.extf %31 : vector<16x64xbf16> to vector<16x64xf32>
    %c4_18 = arith.constant 4 : index
    %c0_19 = arith.constant 0 : index
    %33 = vector.load %arg2[%c4_18, %c0_19] : memref<9x64xf32, #tpu.memory_space<vmem>>, vector<1x64xf32>
    %34 = vector.broadcast %33 : vector<1x64xf32> to vector<16x64xf32>
    %35 = arith.mulf %32, %34 : vector<16x64xf32>
    %36 = arith.addf %29, %35 : vector<16x64xf32>
    %c0_20 = arith.constant 0 : index
    %c1_21 = arith.constant 1 : index
    %c8_22 = arith.constant 8 : index
    %37 = vector.load %arg1[%c0_20, %c1_21, %c8_22] : memref<1x18x72xbf16, #tpu.memory_space<vmem>>, vector<1x16x64xbf16>
    %38 = vector.shape_cast %37 : vector<1x16x64xbf16> to vector<16x64xbf16>
    %39 = arith.extf %38 : vector<16x64xbf16> to vector<16x64xf32>
    %c5 = arith.constant 5 : index
    %c0_23 = arith.constant 0 : index
    %40 = vector.load %arg2[%c5, %c0_23] : memref<9x64xf32, #tpu.memory_space<vmem>>, vector<1x64xf32>
    %41 = vector.broadcast %40 : vector<1x64xf32> to vector<16x64xf32>
    %42 = arith.mulf %39, %41 : vector<16x64xf32>
    %43 = arith.addf %36, %42 : vector<16x64xf32>
    %cst_24 = arith.constant 0.000000e+00 : f32
    %44 = vector.broadcast %cst_24 : f32 to vector<16x64xf32>
    %c0_25 = arith.constant 0 : index
    %c2_26 = arith.constant 2 : index
    %c0_27 = arith.constant 0 : index
    %45 = vector.load %arg1[%c0_25, %c2_26, %c0_27] : memref<1x18x72xbf16, #tpu.memory_space<vmem>>, vector<1x16x64xbf16>
    %46 = vector.shape_cast %45 : vector<1x16x64xbf16> to vector<16x64xbf16>
    %47 = arith.extf %46 : vector<16x64xbf16> to vector<16x64xf32>
    %c6 = arith.constant 6 : index
    %c0_28 = arith.constant 0 : index
    %48 = vector.load %arg2[%c6, %c0_28] : memref<9x64xf32, #tpu.memory_space<vmem>>, vector<1x64xf32>
    %49 = vector.broadcast %48 : vector<1x64xf32> to vector<16x64xf32>
    %50 = arith.mulf %47, %49 : vector<16x64xf32>
    %51 = arith.addf %44, %50 : vector<16x64xf32>
    %c0_29 = arith.constant 0 : index
    %c2_30 = arith.constant 2 : index
    %c4_31 = arith.constant 4 : index
    %52 = vector.load %arg1[%c0_29, %c2_30, %c4_31] : memref<1x18x72xbf16, #tpu.memory_space<vmem>>, vector<1x16x64xbf16>
    %53 = vector.shape_cast %52 : vector<1x16x64xbf16> to vector<16x64xbf16>
    %54 = arith.extf %53 : vector<16x64xbf16> to vector<16x64xf32>
    %c7 = arith.constant 7 : index
    %c0_32 = arith.constant 0 : index
    %55 = vector.load %arg2[%c7, %c0_32] : memref<9x64xf32, #tpu.memory_space<vmem>>, vector<1x64xf32>
    %56 = vector.broadcast %55 : vector<1x64xf32> to vector<16x64xf32>
    %57 = arith.mulf %54, %56 : vector<16x64xf32>
    %58 = arith.addf %51, %57 : vector<16x64xf32>
    %c0_33 = arith.constant 0 : index
    %c2_34 = arith.constant 2 : index
    %c8_35 = arith.constant 8 : index
    %59 = vector.load %arg1[%c0_33, %c2_34, %c8_35] : memref<1x18x72xbf16, #tpu.memory_space<vmem>>, vector<1x16x64xbf16>
    %60 = vector.shape_cast %59 : vector<1x16x64xbf16> to vector<16x64xbf16>
    %61 = arith.extf %60 : vector<16x64xbf16> to vector<16x64xf32>
    %c8_36 = arith.constant 8 : index
    %c0_37 = arith.constant 0 : index
    %62 = vector.load %arg2[%c8_36, %c0_37] : memref<9x64xf32, #tpu.memory_space<vmem>>, vector<1x64xf32>
    %63 = vector.broadcast %62 : vector<1x64xf32> to vector<16x64xf32>
    %64 = arith.mulf %61, %63 : vector<16x64xf32>
    %65 = arith.addf %58, %64 : vector<16x64xf32>
    %66 = arith.addf %21, %43 : vector<16x64xf32>
    %67 = arith.addf %66, %65 : vector<16x64xf32>
    %c0_38 = arith.constant 0 : index
    %c0_39 = arith.constant 0 : index
    %68 = vector.load %arg4[%c0_38, %c0_39] : memref<1x64xf32, #tpu.memory_space<vmem>>, vector<1x64xf32>
    %69 = vector.broadcast %68 : vector<1x64xf32> to vector<16x64xf32>
    %70 = arith.addf %67, %69 : vector<16x64xf32>
    %cst_40 = arith.constant 0.000000e+00 : f32
    %71 = vector.broadcast %cst_40 : f32 to vector<16x64xf32>
    %72 = arith.maximumf %70, %71 : vector<16x64xf32>
    %c0_41 = arith.constant 0 : index
    %c0_42 = arith.constant 0 : index
    %73 = vector.load %arg3[%c0_41, %c0_42] : memref<64x128xf32, #tpu.memory_space<vmem>>, vector<64x128xf32>
    %cst_43 = arith.constant dense<0.000000e+00> : vector<16x128xf32>
    %74 = tpu.matmul %72, %73, %cst_43 {dimension_numbers = #tpu.dot_dimension_numbers<[1], [0], [0], [1], [0, 0, 1, 1], [], []>} : vector<16x64xf32>, vector<64x128xf32>, vector<16x128xf32> -> vector<16x128xf32>
    %c0_44 = arith.constant 0 : index
    %c0_45 = arith.constant 0 : index
    %75 = vector.load %arg5[%c0_44, %c0_45] : memref<1x128xf32, #tpu.memory_space<vmem>>, vector<1x128xf32>
    %76 = vector.broadcast %75 : vector<1x128xf32> to vector<16x128xf32>
    %77 = arith.addf %74, %76 : vector<16x128xf32>
    %cst_46 = arith.constant 0.000000e+00 : f32
    %78 = vector.broadcast %cst_46 : f32 to vector<16x128xf32>
    %79 = arith.maximumf %77, %78 : vector<16x128xf32>
    %c0_47 = arith.constant 0 : index
    %c0_48 = arith.constant 0 : index
    %c0_49 = arith.constant 0 : index
    %80 = vector.load %arg6[%c0_47, %c0_48, %c0_49] : memref<1x16x128xf32, #tpu.memory_space<vmem>>, vector<1x16x128xf32>
    %81 = vector.shape_cast %80 : vector<1x16x128xf32> to vector<16x128xf32>
    %82 = vector.shape_cast %79 : vector<16x128xf32> to vector<1x16x128xf32>
    tpu.vector_store %arg6[%c0_47, %c0_48, %c0_49], %82 {strides = array<i32>} : memref<1x16x128xf32, #tpu.memory_space<vmem>>, vector<1x16x128xf32>,
    return
  }
  func.func @transform_0(%arg0: i32) -> (i32, i32, i32) {
    %c0_i32 = arith.constant 0 : i32
    %c0_i32_0 = arith.constant 0 : i32
    %c0_i32_1 = arith.constant 0 : i32
    return %arg0, %c0_i32, %c0_i32_0 : i32, i32, i32
  }
  func.func @transform_1(%arg0: i32) -> (i32, i32) {
    %c0_i32 = arith.constant 0 : i32
    %c0_i32_0 = arith.constant 0 : i32
    %c0_i32_1 = arith.constant 0 : i32
    return %c0_i32, %c0_i32_0 : i32, i32
  }
  func.func @transform_2(%arg0: i32) -> (i32, i32) {
    %c0_i32 = arith.constant 0 : i32
    %c0_i32_0 = arith.constant 0 : i32
    %c0_i32_1 = arith.constant 0 : i32
    return %c0_i32, %c0_i32_0 : i32, i32
  }
  func.func @transform_3(%arg0: i32) -> (i32, i32) {
    %c0_i32 = arith.constant 0 : i32
    %c0_i32_0 = arith.constant 0 : i32
    %c0_i32_1 = arith.constant 0 : i32
    return %c0_i32, %c0_i32_0 : i32, i32
  }
  func.func @transform_4(%arg0: i32) -> (i32, i32) {
    %c0_i32 = arith.constant 0 : i32
    %c0_i32_0 = arith.constant 0 : i32
    %c0_i32_1 = arith.constant 0 : i32
    return %c0_i32, %c0_i32_0 : i32, i32
  }
  func.func @transform_5(%arg0: i32) -> (i32, i32, i32) {
    %c0_i32 = arith.constant 0 : i32
    %c0_i32_0 = arith.constant 0 : i32
    %c0_i32_1 = arith.constant 0 : i32
    return %arg0, %c0_i32, %c0_i32_0 : i32, i32, i32
  }
}

</mosaic_0001>

<llo_original>
// kernel: tpu_custom_call.1
$region0: #{tpu_custom_call.1}
  #allocation0 [shape = 'u32[]', space=smem, size = 0x4, offset = 0x4, fixed_abs, tag = 'smem constant byte address 0x4 - core index']
  #allocation1 [shape = 'u32[144,128]{1,0:T(1,128)}', space=vmem, size = 0x12000, scoped, tag = 'internal scratch']
  %s0 = inlined_call_operand.vmem [shape: bf16[2,18,72], index: 0, kind: input, shape index: {}]
  %s1 = inlined_call_operand.vmem [shape: f32[9,64], index: 1, kind: input, shape index: {}]
  %s2 = inlined_call_operand.hbm [shape: f32[64,128], index: 2, kind: input, shape index: {}]
  %s3 = inlined_call_operand.vmem [shape: f32[1,64], index: 3, kind: input, shape index: {}]
  %s4 = inlined_call_operand.vmem [shape: f32[1,128], index: 4, kind: input, shape index: {}]
  %s5 = inlined_call_operand.hbm [shape: f32[2,16,128], index: 5, kind: output, shape index: {}]
  %s6 = sld [smem:[#allocation0]]
  $region57: #{tpu_custom_call.1} parent=0
    _
  %s8 = ssub.s32 1, %s6
  %s9 = scalar_select 0, %s8, %s6
  $region1: #{tpu_custom_call.1} parent=0
    #allocation2 [shape = 'u8[32768]{0}', space=vmem, size = 0x8000, scoped, tag = 'input window, operand 2, single buffered']
    #allocation3 [shape = 's32[2]{0}', space=sflag, size = 0x8, scoped, tag = 'scoped memory for tpu_custom_call.1']
    #allocation4 [shape = 's32[2]{0}', space=sflag, size = 0x8, scoped, tag = 'scoped memory for tpu_custom_call.1']
    #allocation5 [shape = 'u8[16384]{0}', space=vmem, size = 0x4000, scoped, tag = 'output window, operand 0']
    %10 = vsyncpa [#allocation3], 0
    %11 = vsyncpa [#allocation4], 0
    %s12 = scalar_lea.sflag [#allocation4], 1
    %13 = vsyncpa %s12, 0
    loop: start=0, step=1, limit=4
    $region2: #{tpu_custom_call.1} parent=1 // loop_pre_header
      _
    $region3: #{tpu_custom_call.1} parent=1 // loop_header
      %s15 = sphi 0, %s19
      %p16 = scmp.ge.s32.totalorder %s15, 4
      %s25 = sphi 0, %s27
      %s28 = sphi 0, %s25
      %s29 = sphi 0, %s28
      %s45 = sphi 0, %s29
      %s49 = sphi 0, %s49
      %s51 = sphi 0, %s49
      %s52 = sphi 0, %s51
      %s66 = sphi 0, %s52
      %s70 = sphi 0, %s70
      %s72 = sphi 0, %s70
      %s73 = sphi 0, %s72
      %s87 = sphi 0, %s73
      %s91 = sphi 0, %s91
      %s93 = sphi 0, %s91
      %s94 = sphi 0, %s93
      %s108 = sphi 0, %s94
      %s112 = sphi 0, %s112
      %s114 = sphi 0, %s112
      %s115 = sphi 0, %s114
      %s129 = sphi 0, %s115
      %s135 = sphi 0, %s137
      %s138 = sphi 0, %s135
      %s139 = sphi 0, %s138
      %s155 = sphi 0, %s139
    $region4: #{tpu_custom_call.1} parent=1 // loop_header_branch
      %18 = sbr.rel (%p16) target = $region8
    $region5: #{tpu_custom_call.1} parent=1 // loop_body
      %s20 = ssub.s32 %s15, 1
      %s21 = ssub.s32 %s15, 2
      %s22 = sadd.s32 %s15, 1
      %s23 = ssub.s32 %s15, %s22
      %p24 = scmp.eq.s32.totalorder %s23, 0
      %s26 = sadd.s32 %s25, 1
      %s27 = scalar_select %p24, %s25, %s26
      %p30 = pneg %p24
      %p31 = scmp.eq.s32.totalorder %s15, 1
      %p32 = por %p30, %p31
      %p33 = scmp.ne.s32.totalorder %s25, %s28
      %p34 = scmp.eq.s32.totalorder %s15, 0
      %p35 = por %p33, %p34
      %p36 = scmp.ne.s32.totalorder %s25, %s28
      %p37 = scmp.eq.s32.totalorder %s20, 1
      %p38 = por %p36, %p37
      %p39 = scmp.ne.s32.totalorder %s28, %s29
      %p40 = scmp.eq.s32.totalorder %s20, 0
      %p41 = por %p39, %p40
      %p42 = scmp.ne.s32.totalorder %s28, %s29
      %p43 = scmp.eq.s32.totalorder %s21, 1
      %p44 = por %p42, %p43
      %p46 = scmp.ne.s32.totalorder %s29, %s45
      %p47 = scmp.eq.s32.totalorder %s21, 0
      %p48 = por %p46, %p47
      %s50 = sadd.s32 %s49, 1
      %p53 = scmp.eq.s32.totalorder %s15, 1
      %p54 = scmp.ne.s32.totalorder %s49, %s51
      %p55 = scmp.eq.s32.totalorder %s15, 0
      %p56 = por %p54, %p55
      %p57 = scmp.ne.s32.totalorder %s49, %s51
      %p58 = scmp.eq.s32.totalorder %s20, 1
      %p59 = por %p57, %p58
      %p60 = scmp.ne.s32.totalorder %s51, %s52
      %p61 = scmp.eq.s32.totalorder %s20, 0
      %p62 = por %p60, %p61
      %p63 = scmp.ne.s32.totalorder %s51, %s52
      %p64 = scmp.eq.s32.totalorder %s21, 1
      %p65 = por %p63, %p64
      %p67 = scmp.ne.s32.totalorder %s52, %s66
      %p68 = scmp.eq.s32.totalorder %s21, 0
      %p69 = por %p67, %p68
      %s71 = sadd.s32 %s70, 1
      %p74 = scmp.eq.s32.totalorder %s15, 1
      %p75 = scmp.ne.s32.totalorder %s70, %s72
      %p76 = scmp.eq.s32.totalorder %s15, 0
      %p77 = por %p75, %p76
      %p78 = scmp.ne.s32.totalorder %s70, %s72
      %p79 = scmp.eq.s32.totalorder %s20, 1
      %p80 = por %p78, %p79
      %p81 = scmp.ne.s32.totalorder %s72, %s73
      %p82 = scmp.eq.s32.totalorder %s20, 0
      %p83 = por %p81, %p82
      %p84 = scmp.ne.s32.totalorder %s72, %s73
      %p85 = scmp.eq.s32.totalorder %s21, 1
      %p86 = por %p84, %p85
      %p88 = scmp.ne.s32.totalorder %s73, %s87
      %p89 = scmp.eq.s32.totalorder %s21, 0
      %p90 = por %p88, %p89
      %s92 = sadd.s32 %s91, 1
      %p95 = scmp.eq.s32.totalorder %s15, 1
      %p96 = scmp.ne.s32.totalorder %s91, %s93
      %p97 = scmp.eq.s32.totalorder %s15, 0
      %p98 = por %p96, %p97
      %p99 = scmp.ne.s32.totalorder %s91, %s93
      %p100 = scmp.eq.s32.totalorder %s20, 1
      %p101 = por %p99, %p100
      %p102 = scmp.ne.s32.totalorder %s93, %s94
      %p103 = scmp.eq.s32.totalorder %s20, 0
      %p104 = por %p102, %p103
      %p105 = scmp.ne.s32.totalorder %s93, %s94
      %p106 = scmp.eq.s32.totalorder %s21, 1
      %p107 = por %p105, %p106
      %p109 = scmp.ne.s32.totalorder %s94, %s108
      %p110 = scmp.eq.s32.totalorder %s21, 0
      %p111 = por %p109, %p110
      %s113 = sadd.s32 %s112, 1
      %p116 = scmp.eq.s32.totalorder %s15, 1
      %p117 = scmp.ne.s32.totalorder %s112, %s114
      %p118 = scmp.eq.s32.totalorder %s15, 0
      %p119 = por %p117, %p118
      %p120 = scmp.ne.s32.totalorder %s112, %s114
      %p121 = scmp.eq.s32.totalorder %s20, 1
      %p122 = por %p120, %p121
      %p123 = scmp.ne.s32.totalorder %s114, %s115
      %p124 = scmp.eq.s32.totalorder %s20, 0
      %p125 = por %p123, %p124
      %p126 = scmp.ne.s32.totalorder %s114, %s115
      %p127 = scmp.eq.s32.totalorder %s21, 1
      %p128 = por %p126, %p127
      %p130 = scmp.ne.s32.totalorder %s115, %s129
      %p131 = scmp.eq.s32.totalorder %s21, 0
      %p132 = por %p130, %p131
      %s133 = ssub.s32 %s15, %s22
      %p134 = scmp.eq.s32.totalorder %s133, 0
      %s136 = sadd.s32 %s135, 1
      %s137 = scalar_select %p134, %s135, %s136
      %p140 = pneg %p134
      %p141 = scmp.eq.s32.totalorder %s15, 1
      %p142 = por %p140, %p141
      %p143 = scmp.ne.s32.totalorder %s135, %s138
      %p144 = scmp.eq.s32.totalorder %s15, 0
      %p145 = por %p143, %p144
      %p146 = scmp.ne.s32.totalorder %s135, %s138
      %p147 = scmp.eq.s32.totalorder %s20, 1
      %p148 = por %p146, %p147
      %p149 = scmp.ne.s32.totalorder %s138, %s139
      %p150 = scmp.eq.s32.totalorder %s20, 0
      %p151 = por %p149, %p150
      %p152 = scmp.ne.s32.totalorder %s138, %s139
      %p153 = scmp.eq.s32.totalorder %s21, 1
      %p154 = por %p152, %p153
      %p156 = scmp.ne.s32.totalorder %s139, %s155
      %p157 = scmp.eq.s32.totalorder %s21, 0
      %p158 = por %p156, %p157
      %p159 = scmp.le.s32.totalorder 1, %s15
      %p160 = scmp.lt.s32.totalorder %s15, 3
      %p161 = pnand %p159, %p160
      %p162 = pneg %p161
      // Predicated region
      $region9: #{tpu_custom_call.1} parent=5 // pred_check
        _
      $region10: #{tpu_custom_call.1} parent=5 // pred_check_branch
        %164 = sbr.rel (%p161) target = $region12
      $region11: #{tpu_custom_call.1} parent=5 // pred_region
        %s165 = ssub.s32 %s15, 1
        // Predicated region
        $region13: #{tpu_custom_call.1} parent=11 // pred_check
          %p166 = pneg %p62
        $region14: #{tpu_custom_call.1} parent=11 // pred_check_branch
          %168 = sbr.rel (%p166) target = $region16
        $region15: #{tpu_custom_call.1} parent=11 // pred_region
          _
        $region16: #{tpu_custom_call.1} parent=11 // pred_fallthru
          _
        // Predicated region
        $region17: #{tpu_custom_call.1} parent=11 // pred_check
          %p169 = pneg %p83
        $region18: #{tpu_custom_call.1} parent=11 // pred_check_branch
          %171 = sbr.rel (%p169) target = $region20
        $region19: #{tpu_custom_call.1} parent=11 // pred_region
          %s173 = ssub.s32 1024, 1024
          %174 = vsyncadd [#allocation3], %s173
          %s175 = sshll.u32 [#allocation2], 4
          %s176 = int_to_ptr.vmem [resolvable:$true] %s175
          %181 = dma.hbm_to_vmem [thread:$0]  %s2, 1024, %s176, [#allocation3], 128, 128, 8
        $region20: #{tpu_custom_call.1} parent=11 // pred_fallthru
          _
        // Predicated region
        $region21: #{tpu_custom_call.1} parent=11 // pred_check
          %p182 = pneg %p104
        $region22: #{tpu_custom_call.1} parent=11 // pred_check_branch
          %184 = sbr.rel (%p182) target = $region24
        $region23: #{tpu_custom_call.1} parent=11 // pred_region
          _
        $region24: #{tpu_custom_call.1} parent=11 // pred_fallthru
          _
        // Predicated region
        $region25: #{tpu_custom_call.1} parent=11 // pred_check
          %p185 = pneg %p125
        $region26: #{tpu_custom_call.1} parent=11 // pred_check_branch
          %187 = sbr.rel (%p185) target = $region28
        $region27: #{tpu_custom_call.1} parent=11 // pred_region
          _
        $region28: #{tpu_custom_call.1} parent=11 // pred_fallthru
          _
      $region12: #{tpu_custom_call.1} parent=5 // pred_fallthru
        _
      %p188 = scmp.lt.s32.totalorder %s15, 2
      // Predicated region
      $region29: #{tpu_custom_call.1} parent=5 // pred_check
        %p189 = pneg %p188
      $region30: #{tpu_custom_call.1} parent=5 // pred_check_branch
        %191 = sbr.rel (%p189) target = $region32
      $region31: #{tpu_custom_call.1} parent=5 // pred_region
        // Predicated region
        $region33: #{tpu_custom_call.1} parent=31 // pred_check
          %p192 = pneg %p35
        $region34: #{tpu_custom_call.1} parent=31 // pred_check_branch
          %194 = sbr.rel (%p192) target = $region36
        $region35: #{tpu_custom_call.1} parent=31 // pred_region
          %p195 = scmp.lt.s32.totalorder %s15, 1
          %s196 = scalar_select %p195, %s15, 1
          %s197 = smul.addr %s196, 3
          %s198 = smul.addr %s197, 4
          %s199 = scalar_lea.vmem %s0, %s198
        $region36: #{tpu_custom_call.1} parent=31 // pred_fallthru
          _
      $region32: #{tpu_custom_call.1} parent=5 // pred_fallthru
        _
      %p200 = scmp.le.s32.totalorder 1, %s15
      %p201 = scmp.lt.s32.totalorder %s15, 3
      %p202 = pnand %p200, %p201
      %p203 = pneg %p202
      // Predicated region
      $region37: #{tpu_custom_call.1} parent=5 // pred_check
        _
      $region38: #{tpu_custom_call.1} parent=5 // pred_check_branch
        %205 = sbr.rel (%p202) target = $region40
      $region39: #{tpu_custom_call.1} parent=5 // pred_region
        %s206 = ssub.s32 %s15, 1
        // Predicated region
        $region41: #{tpu_custom_call.1} parent=39 // pred_check
          %p207 = pneg %p83
        $region42: #{tpu_custom_call.1} parent=39 // pred_check_branch
          %209 = sbr.rel (%p207) target = $region44
        $region43: #{tpu_custom_call.1} parent=39 // pred_region
          %210 = dma.done [#allocation3], 1024
        $region44: #{tpu_custom_call.1} parent=39 // pred_fallthru
          _
        %p211 = scmp.lt.s32.totalorder %s20, 1
        %s212 = scalar_select %p211, %s20, 1
        %s213 = smul.addr %s212, 3
        %s214 = smul.addr %s213, 4
        %s215 = scalar_lea.vmem %s0, %s214
        %p216 = pneg %p41
        %p217 = pneg %p38
        %p218 = pneg %p62
        %p219 = pneg %p59
        %p220 = pneg %p83
        %p221 = pneg %p80
        %p222 = pneg %p104
        %p223 = pneg %p101
        %p224 = pneg %p125
        %p225 = pneg %p122
        %p226 = pneg %p151
        %p227 = pneg %p148
        %s228 = sand.u32 %s138, 1
        %s229 = scalar_lea.sflag [#allocation4], %s228
        %s230 = sand.u32 %s138, 1
        %s231 = smul.addr %s230, 16
        %s232 = scalar_lea.vmem [#allocation5], %s231
        %p233 = scmp.lt.s32.totalorder %s20, 1
        %s234 = scalar_select %p233, %s20, 1
        %s235 = smul.addr %s234, 3
        %s236 = smul.addr %s235, 4
        %s237 = scalar_lea.vmem %s0, %s236
        %v238 = vld [vmem:[%s237] sm:$0xf]
        %v239 = vld [vmem:[%s237 + $0x4] sm:$0xf]
        %v240 = vunpack.c.l.bf16 %v238
        %v241 = vunpack.c.l.bf16 %v239
        %v242 = vld [vmem:[%s1] sm:$0x1]
        %v243 = vlaneseq
        %v244 = vshrl.u32 %v243, 7
        %v245 = vsub.s32 0, %v244
        %v246 = vrot.slane %v242, %v245
        %v247 = vmul.f32 %v240, %v246
        %v248 = vmul.f32 %v241, %v246
        %v249 = vadd.f32 %v247, 0.0
        %v250 = vadd.f32 %v248, 0.0
        %v251 = vld [vmem:[%s1 + $0x1] sm:$0x1]
        %v252 = vlaneseq
        %v253 = vshrl.u32 %v252, 7
        %v254 = vsub.s32 0, %v253
        %v255 = vrot.slane %v251, %v254
        %257 = vrot.lane.b32.xlu0 %v255, 4
        %v258 = vpop.permute.xlu0 %257
        %v260 = vmul.f32 %v240, %v258
        %v261 = vmul.f32 %v241, %v258
        %264 = vrot.lane.b32.xlu0 %v260, 124
        %v265 = vpop.permute.xlu0 %264
        %266 = vrot.lane.b32.xlu0 %v261, 124
        %v267 = vpop.permute.xlu0 %266
        %v270 = vadd.f32 %v249, %v265
        %v271 = vadd.f32 %v250, %v267
        %v272 = vld [vmem:[%s1 + $0x2] sm:$0x1]
        %v273 = vlaneseq
        %v274 = vshrl.u32 %v273, 7
        %v275 = vsub.s32 0, %v274
        %v276 = vrot.slane %v272, %v275
        %278 = vrot.lane.b32.xlu0 %v276, 8
        %v279 = vpop.permute.xlu0 %278
        %v281 = vmul.f32 %v240, %v279
        %v282 = vmul.f32 %v241, %v279
        %285 = vrot.lane.b32.xlu0 %v281, 120
        %v286 = vpop.permute.xlu0 %285
        %287 = vrot.lane.b32.xlu0 %v282, 120
        %v288 = vpop.permute.xlu0 %287
        %v291 = vadd.f32 %v270, %v286
        %v292 = vadd.f32 %v271, %v288
        %v293 = vld [vmem:[%s237 + $0x8] sm:$0x1]
        %v294 = vunpack.c.l.bf16 %v293
        %v295 = vld [vmem:[%s1 + $0x3] sm:$0x1]
        %v296 = vlaneseq
        %v297 = vshrl.u32 %v296, 7
        %v298 = vsub.s32 0, %v297
        %v299 = vrot.slane %v295, %v298
        %v300 = vmul.f32 %v240, %v299
        %v301 = vmul.f32 %v241, %v299
        %v302 = vmul.f32 %v294, %v299
        %v303 = vadd.f32 %v300, 0.0
        %v304 = vadd.f32 %v301, 0.0
        %v305 = vadd.f32 %v302, 0.0
        %v306 = vld [vmem:[%s1 + $0x4] sm:$0x1]
        %v307 = vlaneseq
        %v308 = vshrl.u32 %v307, 7
        %v309 = vsub.s32 0, %v308
        %v310 = vrot.slane %v306, %v309
        %312 = vrot.lane.b32.xlu0 %v310, 4
        %v313 = vpop.permute.xlu0 %312
        %v315 = vmul.f32 %v240, %v313
        %v316 = vmul.f32 %v241, %v313
        %v317 = vmul.f32 %v294, %v313
        %321 = vrot.lane.b32.xlu0 %v315, 124
        %v322 = vpop.permute.xlu0 %321
        %323 = vrot.lane.b32.xlu0 %v316, 124
        %v324 = vpop.permute.xlu0 %323
        %325 = vrot.lane.b32.xlu0 %v317, 124
        %v326 = vpop.permute.xlu0 %325
        %v330 = vadd.f32 %v303, %v322
        %v331 = vadd.f32 %v304, %v324
        %v332 = vadd.f32 %v305, %v326
        %v333 = vld [vmem:[%s1 + $0x5] sm:$0x1]
        %v334 = vlaneseq
        %v335 = vshrl.u32 %v334, 7
        %v336 = vsub.s32 0, %v335
        %v337 = vrot.slane %v333, %v336
        %339 = vrot.lane.b32.xlu0 %v337, 8
        %v340 = vpop.permute.xlu0 %339
        %v342 = vmul.f32 %v240, %v340
        %v343 = vmul.f32 %v241, %v340
        %v344 = vmul.f32 %v294, %v340
        %348 = vrot.lane.b32.xlu0 %v342, 120
        %v349 = vpop.permute.xlu0 %348
        %350 = vrot.lane.b32.xlu0 %v343, 120
        %v351 = vpop.permute.xlu0 %350
        %352 = vrot.lane.b32.xlu0 %v344, 120
        %v353 = vpop.permute.xlu0 %352
        %v357 = vadd.f32 %v330, %v349
        %v358 = vadd.f32 %v331, %v351
        %v359 = vadd.f32 %v332, %v353
        %v360 = vld [vmem:[%s237] sm:$0xe]
        %v361 = vunpack.c.l.bf16 %v360
        %v362 = vld [vmem:[%s1 + $0x6] sm:$0x1]
        %v363 = vlaneseq
        %v364 = vshrl.u32 %v363, 7
        %v365 = vsub.s32 0, %v364
        %v366 = vrot.slane %v362, %v365
        %v367 = vmul.f32 %v361, %v366
        %v368 = vmul.f32 %v241, %v366
        %v369 = vmul.f32 %v294, %v366
        %v370 = vadd.f32 %v367, 0.0
        %v371 = vadd.f32 %v368, 0.0
        %v372 = vadd.f32 %v369, 0.0
        %v373 = vld [vmem:[%s1 + $0x7] sm:$0x1]
        %v374 = vlaneseq
        %v375 = vshrl.u32 %v374, 7
        %v376 = vsub.s32 0, %v375
        %v377 = vrot.slane %v373, %v376
        %379 = vrot.lane.b32.xlu0 %v377, 4
        %v380 = vpop.permute.xlu0 %379
        %v382 = vmul.f32 %v361, %v380
        %v383 = vmul.f32 %v241, %v380
        %v384 = vmul.f32 %v294, %v380
        %388 = vrot.lane.b32.xlu0 %v382, 124
        %v389 = vpop.permute.xlu0 %388
        %390 = vrot.lane.b32.xlu0 %v383, 124
        %v391 = vpop.permute.xlu0 %390
        %392 = vrot.lane.b32.xlu0 %v384, 124
        %v393 = vpop.permute.xlu0 %392
        %v397 = vadd.f32 %v370, %v389
        %v398 = vadd.f32 %v371, %v391
        %v399 = vadd.f32 %v372, %v393
        %v400 = vld [vmem:[%s1 + $0x8] sm:$0x1]
        %v401 = vlaneseq
        %v402 = vshrl.u32 %v401, 7
        %v403 = vsub.s32 0, %v402
        %v404 = vrot.slane %v400, %v403
        %406 = vrot.lane.b32.xlu0 %v404, 8
        %v407 = vpop.permute.xlu0 %406
        %v409 = vmul.f32 %v361, %v407
        %v410 = vmul.f32 %v241, %v407
        %v411 = vmul.f32 %v294, %v407
        %415 = vrot.lane.b32.xlu0 %v409, 120
        %v416 = vpop.permute.xlu0 %415
        %417 = vrot.lane.b32.xlu0 %v410, 120
        %v418 = vpop.permute.xlu0 %417
        %419 = vrot.lane.b32.xlu0 %v411, 120
        %v420 = vpop.permute.xlu0 %419
        %v424 = vadd.f32 %v397, %v416
        %v425 = vadd.f32 %v398, %v418
        %v426 = vadd.f32 %v399, %v420
        %vm430 = vcmask 1046528
        %v431 = vrot.slane %v357, 1
        %v432 = vrot.slane %v358, 1
        %v433 = vsel %vm430, %v431, %v432
        %v434 = vrot.slane %v359, 1
        %v435 = vsel %vm430, %v432, %v434
        %v438 = vadd.f32 %v291, %v433
        %v439 = vadd.f32 %v292, %v435
        %vm443 = vcmask 1045504
        %v444 = vrot.slane %v424, 2
        %v445 = vrot.slane %v425, 2
        %v446 = vsel %vm443, %v444, %v445
        %v447 = vrot.slane %v426, 2
        %v448 = vsel %vm443, %v445, %v447
        %v451 = vadd.f32 %v438, %v446
        %v452 = vadd.f32 %v439, %v448
        %v453 = vld [vmem:[%s3] sm:$0x1]
        %v455 = vlaneseq
        %v456 = vshrl.u32 %v455, 7
        %v457 = vsub.s32 0, %v456
        %v458 = vrot.slane %v453, %v457
        %v460 = vadd.f32 %v451, %v458
        %v461 = vadd.f32 %v452, %v458
        %v462 = vmax.f32 %v460, 0.0
        %v463 = vmax.f32 %v461, 0.0
        %v464 = vld [vmem:[#allocation2] sm:$0xff]
        %v465 = vld [vmem:[#allocation2 + $0x8] sm:$0xff]
        %v466 = vld [vmem:[#allocation2 + $0x10] sm:$0xff]
        %v467 = vld [vmem:[#allocation2 + $0x18] sm:$0xff]
        %v468 = vld [vmem:[#allocation2 + $0x20] sm:$0xff]
        %v469 = vld [vmem:[#allocation2 + $0x28] sm:$0xff]
        %v470 = vld [vmem:[#allocation2 + $0x30] sm:$0xff]
        %v471 = vld [vmem:[#allocation2 + $0x38] sm:$0xff]
        %v472 = vld [vmem:[%s4] sm:$0x1]
        %v474 = vlaneseq
        %v475 = vshrl.u32 %v474, 7
        %v476 = vsub.s32 0, %v475
        %v477 = vrot.slane %v472, %v476
        %vm479 = vcmask 523264
        %v481 = vsel %vm479, %v462, 0
        %v484 = vsel %vm479, %v463, 0
        %486 = vmatprep.subr.mxu0 0.0
        %487 = vmatpush1.msra.mxu0 0.0
        %488 = vmatprep.subr.mxu0 0.0
        %489 = vmatpush1.msra.mxu0 0.0
        %490 = vmatprep.subr.mxu0 0.0
        %491 = vmatpush1.msra.mxu0 0.0
        %492 = vmatprep.subr.mxu0 0.0
        %493 = vmatpush1.msra.mxu0 0.0
        %494 = vmatprep.subr.mxu0 0.0
        %495 = vmatpush1.msra.mxu0 0.0
        %496 = vmatprep.subr.mxu0 0.0
        %497 = vmatpush1.msra.mxu0 0.0
        %498 = vmatprep.subr.mxu0 0.0
        %499 = vmatpush1.msra.mxu0 0.0
        %500 = vmatprep.subr.mxu0 0.0
        %501 = vmatpush1.msra.mxu0 0.0
        %502 = vmatprep.subr.mxu0 0.0
        %503 = vmatpush1.msra.mxu0 %v471
        %504 = vmatprep.subr.mxu0 0.0
        %505 = vmatpush1.msra.mxu0 %v470
        %506 = vmatprep.subr.mxu0 0.0
        %507 = vmatpush1.msra.mxu0 %v469
        %508 = vmatprep.subr.mxu0 0.0
        %509 = vmatpush1.msra.mxu0 %v468
        %510 = vmatprep.subr.mxu0 0.0
        %511 = vmatpush1.msra.mxu0 %v467
        %512 = vmatprep.subr.mxu0 0.0
        %513 = vmatpush1.msra.mxu0 %v466
        %514 = vmatprep.subr.mxu0 0.0
        %515 = vmatpush1.msra.mxu0 %v465
        %516 = vmatprep.subr.mxu0 0.0
        %517 = vmatpush1.msra.mxu0 %v464
        %518 = vmatprep.subr.mxu0 0.0
        %519 = vmatpush2.msra.mxu0 0.0
        %520 = vmatprep.subr.mxu0 0.0
        %521 = vmatpush2.msra.mxu0 0.0
        %522 = vmatprep.subr.mxu0 0.0
        %523 = vmatpush2.msra.mxu0 0.0
        %524 = vmatprep.subr.mxu0 0.0
        %525 = vmatpush2.msra.mxu0 0.0
        %526 = vmatprep.subr.mxu0 0.0
        %527 = vmatpush2.msra.mxu0 0.0
        %528 = vmatprep.subr.mxu0 0.0
        %529 = vmatpush2.msra.mxu0 0.0
        %530 = vmatprep.subr.mxu0 0.0
        %531 = vmatpush2.msra.mxu0 0.0
        %532 = vmatprep.subr.mxu0 0.0
        %533 = vmatpush2.msra.mxu0 0.0
        %534 = vmatprep.subr.mxu0 0.0
        %535 = vmatpush2.msra.mxu0 0.0
        %536 = vmatprep.subr.mxu0 0.0
        %537 = vmatpush2.msra.mxu0 0.0
        %538 = vmatprep.subr.mxu0 0.0
        %539 = vmatpush2.msra.mxu0 0.0
        %540 = vmatprep.subr.mxu0 0.0
        %541 = vmatpush2.msra.mxu0 0.0
        %542 = vmatprep.subr.mxu0 0.0
        %543 = vmatpush2.msra.mxu0 0.0
        %544 = vmatprep.subr.mxu0 0.0
        %545 = vmatpush2.msra.mxu0 0.0
        %546 = vmatprep.subr.mxu0 0.0
        %547 = vmatpush2.msra.mxu0 0.0
        %548 = vmatprep.subr.mxu0 0.0
        %549 = vmatpush2.msra.mxu0 0.0
        %550 = vmatprep.mubr.f32.mxu0 0.0
        %551 = vmatmul.mubr.f32.gmra.mxu0 %v481
        %v552 = vpop.f32.mrf.mxu0
        %v553 = vadd.f32 %v477, %v552
        %v554 = vpop.f32.mrf.mxu0
        %555 = vmatprep.mubr.f32.mxu0 0.0
        %556 = vmatmul.mubr.f32.gmra.mxu0 %v484
        %v557 = vpop.f32.mrf.mxu0
        %v558 = vadd.f32 %v477, %v557
        %v559 = vpop.f32.mrf.mxu0
        %560 = vdwg.mxu0
        %v561 = vmax.f32 %v553, 0.0
        %v562 = vmax.f32 %v558, 0.0
        %563 = vst [vmem:[%s232] sm:$0xff] %v561
        %564 = vst [vmem:[%s232 + $0x8] sm:$0xff] %v562
        %s565 = sand.u32 %s138, 1
        %s566 = scalar_lea.sflag [#allocation4], %s565
        %s567 = sand.u32 %s138, 1
        %s568 = smul.addr %s567, 16
        %s569 = scalar_lea.vmem [#allocation5], %s568
        // Predicated region
        $region45: #{tpu_custom_call.1} parent=39 // pred_check
          %p570 = pneg %p148
        $region46: #{tpu_custom_call.1} parent=39 // pred_check_branch
          %572 = sbr.rel (%p570) target = $region48
        $region47: #{tpu_custom_call.1} parent=39 // pred_region
          %s574 = ssub.s32 256, 256
          %575 = vsyncadd %s566, %s574
          %s576 = smul.addr %s20, 2
          %s577 = smul.addr %s576, 128
          %s578 = scalar_lea.hbm %s5, %s577
          %s579 = sshll.u32 %s569, 4
          %s580 = int_to_ptr.vmem [resolvable:$true] %s579
          %585 = dma.vmem_to_hbm [thread:$0]  %s580, 256, %s578, %s566, 128, 128, 8
        $region48: #{tpu_custom_call.1} parent=39 // pred_fallthru
          _
      $region40: #{tpu_custom_call.1} parent=5 // pred_fallthru
        _
      %p586 = scmp.le.s32.totalorder 2, %s15
      // Predicated region
      $region49: #{tpu_custom_call.1} parent=5 // pred_check
        %p587 = pneg %p586
      $region50: #{tpu_custom_call.1} parent=5 // pred_check_branch
        %589 = sbr.rel (%p587) target = $region52
      $region51: #{tpu_custom_call.1} parent=5 // pred_region
        %s590 = ssub.s32 %s15, 2
        // Predicated region
        $region53: #{tpu_custom_call.1} parent=51 // pred_check
          %p591 = pneg %p154
        $region54: #{tpu_custom_call.1} parent=51 // pred_check_branch
          %593 = sbr.rel (%p591) target = $region56
        $region55: #{tpu_custom_call.1} parent=51 // pred_region
          %s594 = sand.u32 %s139, 1
          %s595 = scalar_lea.sflag [#allocation4], %s594
          %s596 = sand.u32 %s139, 1
          %s597 = smul.addr %s596, 16
          %s598 = scalar_lea.vmem [#allocation5], %s597
          %599 = dma.done %s595, 256
        $region56: #{tpu_custom_call.1} parent=51 // pred_fallthru
          _
      $region52: #{tpu_custom_call.1} parent=5 // pred_fallthru
        _
    $region6: #{tpu_custom_call.1} parent=1 // loop_footer
      %s19 = sadd.s32 1, %s15
    $region7: #{tpu_custom_call.1} parent=1 // loop_footer_branch
      %14 = sbr.rel target = $region3
    $region8: #{tpu_custom_call.1} parent=1 // loop_exit
      _
    %600 = vsyncpa [#allocation3], 1
    %s601 = scalar_lea.sflag [#allocation3], 1
    %602 = vsyncpa %s601, 1
    %603 = vsyncpa [#allocation4], 1
    %s604 = scalar_lea.sflag [#allocation4], 1
    %605 = vsyncpa %s604, 1

</llo_original>
